<compile_context>
chip_gen: v7x
topology: tpu7x:2x2x1
jax: 0.10.0
libtpu: 0.0.40
codegen_flags: <defaults>
</compile_context>

<pallas_src>
import functools

import jax
import jax.numpy as jnp
from jax.experimental import pallas as pl
from jax.experimental.pallas import tpu as pltpu


def _decoder_kernel(src_ref, dst_ref,
                    w0_ref, b0_ref, w1_ref, b1_ref, w2_ref, b2_ref,
                    out_ref, *, cout):
    # Edge feature = elementwise product of endpoint embeddings, feature-major.
    x = src_ref[...] * dst_ref[...]                               # [Cin, tE]

    # Lin0: Cin -> Cin, ReLU.   (w0 is [out, in]; compute W @ x + b)
    x = jnp.dot(w0_ref[...], x, preferred_element_type=jnp.float32) + b0_ref[...]
    x = jnp.maximum(x, 0.0)

    # Lin1: Cin -> H, ReLU.
    x = jnp.dot(w1_ref[...], x, preferred_element_type=jnp.float32) + b1_ref[...]
    x = jnp.maximum(x, 0.0)                                       # [H, tE]

    # Lin2: H -> cout, sigmoid.
    if cout == 1:
        # VPU multiply + cross-sublane reduce -> lane-dense [1, tE] result.
        z = jnp.sum(x * w2_ref[...], axis=0, keepdims=True) + b2_ref[...]
    else:
        # General case: contract hid (axis 0 of both operands) -> [cout, tE].
        z = jax.lax.dot_general(
            w2_ref[...], x, (((0,), (0,)), ((), ())),
            preferred_element_type=jnp.float32) + b2_ref[...]
    out_ref[...] = jax.nn.sigmoid(z)


@functools.partial(jax.jit, static_argnames=("tile_e",))
def lp_decoder_forward(h, edge, params, *, tile_e=1024):
    """h: [N, Cin] float32, edge: [2, E] int32, params: dict (see init_params)."""
    w0, b0 = params["w0"], params["b0"]          # [Cin, Cin], [Cin, 1]
    w1, b1 = params["w1"], params["b1"]          # [H,   Cin], [H,   1]
    w2, b2 = params["w2"], params["b2"]          # [H,  cout], [cout, 1]
    cin = h.shape[1]
    hid = w1.shape[0]
    cout = w2.shape[1]

    E = edge.shape[1]
    # Clamp tile to the (lane-aligned) problem size so tiny edge sets don't
    # pay for a full 1024-wide tile of wasted compute.
    te = min(int(tile_e), pl.cdiv(E, 128) * 128)
    te = max(te, 128)
    E_pad = pl.cdiv(E, te) * te

    # Pad the (cheap, int32) indices instead of the gathered feature slabs.
    edge_p = edge if E_pad == E else jnp.pad(edge, ((0, 0), (0, E_pad - E)))

    # Gather endpoint embeddings, feature-major (edges on the lane axis).
    h_t = h.T                                                    # [Cin, N]
    src_t = jnp.take(h_t, edge_p[0], axis=1)                     # [Cin, E_pad]
    dst_t = jnp.take(h_t, edge_p[1], axis=1)                     # [Cin, E_pad]

    grid = (E_pad // te,)
    feat_spec = pl.BlockSpec((cin, te), lambda i: (0, i))
    full = lambda r, c: pl.BlockSpec((r, c), lambda i: (0, 0))   # resident weights

    out_t = pl.pallas_call(
        functools.partial(_decoder_kernel, cout=cout),
        out_shape=jax.ShapeDtypeStruct((cout, E_pad), jnp.float32),
        grid_spec=pltpu.PrefetchScalarGridSpec(
            num_scalar_prefetch=0,
            grid=grid,
            in_specs=[
                feat_spec,                 # src_t
                feat_spec,                 # dst_t
                full(cin, cin),            # w0
                full(cin, 1),              # b0
                full(hid, cin),            # w1
                full(hid, 1),              # b1
                full(hid, cout),           # w2
                full(cout, 1),             # b2
            ],
            out_specs=pl.BlockSpec((cout, te), lambda i: (0, i)),
        ),
        compiler_params=pltpu.CompilerParams(
            dimension_semantics=("parallel",)),
    )(src_t, dst_t, w0, b0, w1, b1, w2, b2)

    # [cout, E_pad] -> [E, cout] (PyTorch output layout).
    return out_t[:, :E].T


def init_params(key, in_channels, hidden_channels, out_channels):
    """Deterministic init matching LPDecoder(de_v='v2') layer shapes.

    w0, w1 stored in PyTorch [out, in] orientation; w2 stored [in, out];
    biases stored as column vectors [out, 1]."""
    ks = jax.random.split(key, 6)

    def lin(kw, kb, fin, fout, w_shape):
        bound = 1.0 / (fin ** 0.5)
        w = jax.random.uniform(kw, w_shape, jnp.float32, -bound, bound)
        b = jax.random.uniform(kb, (fout, 1), jnp.float32, -bound, bound)
        return w, b

    w0, b0 = lin(ks[0], ks[1], in_channels, in_channels,
                 (in_channels, in_channels))                      # [out, in]
    w1, b1 = lin(ks[2], ks[3], in_channels, hidden_channels,
                 (hidden_channels, in_channels))                  # [out, in]
    w2, b2 = lin(ks[4], ks[5], hidden_channels, out_channels,
                 (hidden_channels, out_channels))                 # [in, out]
    return dict(w0=w0, b0=b0, w1=w1, b1=b1, w2=w2, b2=b2)


def reference_forward(h, edge, params):
    """Pure-JAX reference of the PyTorch forward (eval mode)."""
    x = h[edge[0]] * h[edge[1]]                                   # [E, Cin]
    x = jnp.maximum(x @ params["w0"].T + params["b0"].T, 0.0)
    x = jnp.maximum(x @ params["w1"].T + params["b1"].T, 0.0)
    return jax.nn.sigmoid(x @ params["w2"] + params["b2"].T)


if __name__ == "__main__":
    key = jax.random.PRNGKey(0)
    k_h, k_e, k_p = jax.random.split(key, 3)

    N = 64            # number of nodes
    IN_CH = 32        # in_channels (== encoder output dim)
    HID = 32          # hidden_channels
    OUT = 1           # out_channels (link probability)
    E = 200           # number of edges (not a multiple of tile -> exercises padding)

    h = jax.random.normal(k_h, (N, IN_CH), dtype=jnp.float32)
    edge = jax.random.randint(k_e, (2, E), 0, N, dtype=jnp.int32)
    params = init_params(k_p, IN_CH, HID, OUT)

    ref = reference_forward(h, edge, params)

    # Default (large, auto-clamped) tile and a small tile that forces a
    # multi-step grid + padding path.
    for te in (1024, 128):
        out = jax.block_until_ready(lp_decoder_forward(h, edge, params, tile_e=te))
        assert out.shape == (E, OUT), out.shape
        err = float(jnp.max(jnp.abs(out - ref)))
        assert jnp.allclose(out, ref, atol=3e-5, rtol=1e-4), (te, err)

    print("KERNEL_OK")
</pallas_src>

<mosaic_0001>
module attributes {stable_mosaic.version = 11 : i64} {
  func.func @_decoder_kernel(%arg0: i32, %arg1: memref<32x256xf32, #tpu.memory_space<vmem>>, %arg2: memref<32x256xf32, #tpu.memory_space<vmem>>, %arg3: memref<32x32xf32, #tpu.memory_space<vmem>>, %arg4: memref<32x1xf32, #tpu.memory_space<vmem>>, %arg5: memref<32x32xf32, #tpu.memory_space<vmem>>, %arg6: memref<32x1xf32, #tpu.memory_space<vmem>>, %arg7: memref<32x1xf32, #tpu.memory_space<vmem>>, %arg8: memref<1x1xf32, #tpu.memory_space<vmem>>, %arg9: memref<1x256xf32, #tpu.memory_space<vmem>>) attributes {dimension_semantics = [#tpu.dimension_semantics<parallel>], iteration_bounds = array<i64: 1>, scalar_prefetch = 0 : i64, scratch_operands = 0 : i64, tpu.core_type = #tpu.core_type<tc>, window_params = [{transform_indices = @transform_0, window_bounds = array<i64: 32, 256>}, {transform_indices = @transform_1, window_bounds = array<i64: 32, 256>}, {pipeline_mode = #tpu.pipeline_mode<synchronous>, transform_indices = @transform_2, window_bounds = array<i64: 32, 32>}, {pipeline_mode = #tpu.pipeline_mode<synchronous>, transform_indices = @transform_3, window_bounds = array<i64: 32, 1>}, {pipeline_mode = #tpu.pipeline_mode<synchronous>, transform_indices = @transform_4, window_bounds = array<i64: 32, 32>}, {pipeline_mode = #tpu.pipeline_mode<synchronous>, transform_indices = @transform_5, window_bounds = array<i64: 32, 1>}, {pipeline_mode = #tpu.pipeline_mode<synchronous>, transform_indices = @transform_6, window_bounds = array<i64: 32, 1>}, {pipeline_mode = #tpu.pipeline_mode<synchronous>, transform_indices = @transform_7, window_bounds = array<i64: 1, 1>}, {transform_indices = @transform_8, window_bounds = array<i64: 1, 256>}]} {
    %c0 = arith.constant 0 : index
    %c0_0 = arith.constant 0 : index
    %0 = vector.load %arg1[%c0, %c0_0] : memref<32x256xf32, #tpu.memory_space<vmem>>, vector<32x256xf32>
    %c0_1 = arith.constant 0 : index
    %c0_2 = arith.constant 0 : index
    %1 = vector.load %arg2[%c0_1, %c0_2] : memref<32x256xf32, #tpu.memory_space<vmem>>, vector<32x256xf32>
    %2 = arith.mulf %0, %1 : vector<32x256xf32>
    %c0_3 = arith.constant 0 : index
    %c0_4 = arith.constant 0 : index
    %3 = vector.load %arg3[%c0_3, %c0_4] : memref<32x32xf32, #tpu.memory_space<vmem>>, vector<32x32xf32>
    %cst = arith.constant dense<0.000000e+00> : vector<32x256xf32>
    %4 = tpu.matmul %3, %2, %cst {dimension_numbers = #tpu.dot_dimension_numbers<[1], [0], [0], [1], [0, 0, 1, 1], [], []>} : vector<32x32xf32>, vector<32x256xf32>, vector<32x256xf32> -> vector<32x256xf32>
    %c0_5 = arith.constant 0 : index
    %c0_6 = arith.constant 0 : index
    %5 = vector.load %arg4[%c0_5, %c0_6] : memref<32x1xf32, #tpu.memory_space<vmem>>, vector<32x1xf32>
    %6 = vector.broadcast %5 : vector<32x1xf32> to vector<32x256xf32>
    %7 = arith.addf %4, %6 : vector<32x256xf32>
    %cst_7 = arith.constant 0.000000e+00 : f32
    %8 = vector.broadcast %cst_7 : f32 to vector<32x256xf32>
    %9 = arith.maximumf %7, %8 : vector<32x256xf32>
    %c0_8 = arith.constant 0 : index
    %c0_9 = arith.constant 0 : index
    %10 = vector.load %arg5[%c0_8, %c0_9] : memref<32x32xf32, #tpu.memory_space<vmem>>, vector<32x32xf32>
    %cst_10 = arith.constant dense<0.000000e+00> : vector<32x256xf32>
    %11 = tpu.matmul %10, %9, %cst_10 {dimension_numbers = #tpu.dot_dimension_numbers<[1], [0], [0], [1], [0, 0, 1, 1], [], []>} : vector<32x32xf32>, vector<32x256xf32>, vector<32x256xf32> -> vector<32x256xf32>
    %c0_11 = arith.constant 0 : index
    %c0_12 = arith.constant 0 : index
    %12 = vector.load %arg6[%c0_11, %c0_12] : memref<32x1xf32, #tpu.memory_space<vmem>>, vector<32x1xf32>
    %13 = vector.broadcast %12 : vector<32x1xf32> to vector<32x256xf32>
    %14 = arith.addf %11, %13 : vector<32x256xf32>
    %cst_13 = arith.constant 0.000000e+00 : f32
    %15 = vector.broadcast %cst_13 : f32 to vector<32x256xf32>
    %16 = arith.maximumf %14, %15 : vector<32x256xf32>
    %c0_14 = arith.constant 0 : index
    %c0_15 = arith.constant 0 : index
    %17 = vector.load %arg7[%c0_14, %c0_15] : memref<32x1xf32, #tpu.memory_space<vmem>>, vector<32x1xf32>
    %18 = vector.broadcast %17 : vector<32x1xf32> to vector<32x256xf32>
    %19 = arith.mulf %16, %18 : vector<32x256xf32>
    %cst_16 = arith.constant dense<0.000000e+00> : vector<256xf32>
    %20 = vector.multi_reduction <add>, %19, %cst_16 [0] : vector<32x256xf32> to vector<256xf32>
    %21 = vector.shape_cast %20 : vector<256xf32> to vector<1x256xf32>
    %c0_17 = arith.constant 0 : index
    %c0_18 = arith.constant 0 : index
    %22 = vector.load %arg8[%c0_17, %c0_18] : memref<1x1xf32, #tpu.memory_space<vmem>>, vector<1x1xf32>
    %23 = vector.broadcast %22 : vector<1x1xf32> to vector<1x256xf32>
    %24 = arith.addf %21, %23 : vector<1x256xf32>
    %25 = arith.negf %24 : vector<1x256xf32>
    %26 = math.exp %25 : vector<1x256xf32>
    %cst_19 = arith.constant 1.000000e+00 : f32
    %27 = vector.broadcast %cst_19 : f32 to vector<1x256xf32>
    %28 = arith.addf %27, %26 : vector<1x256xf32>
    %29 = arith.divf %27, %28 : vector<1x256xf32>
    %c0_20 = arith.constant 0 : index
    %c0_21 = arith.constant 0 : index
    %30 = vector.load %arg9[%c0_20, %c0_21] : memref<1x256xf32, #tpu.memory_space<vmem>>, vector<1x256xf32>
    tpu.vector_store %arg9[%c0_20, %c0_21], %29 {strides = array<i32>} : memref<1x256xf32, #tpu.memory_space<vmem>>, vector<1x256xf32>,
    return
  }
  func.func @transform_0(%arg0: i32) -> (i32, i32) {
    %c0_i32 = arith.constant 0 : i32
    %c0_i32_0 = arith.constant 0 : i32
    return %c0_i32, %arg0 : i32, i32
  }
  func.func @transform_1(%arg0: i32) -> (i32, i32) {
    %c0_i32 = arith.constant 0 : i32
    %c0_i32_0 = arith.constant 0 : i32
    return %c0_i32, %arg0 : i32, i32
  }
  func.func @transform_2(%arg0: i32) -> (i32, i32) {
    %c0_i32 = arith.constant 0 : i32
    %c0_i32_0 = arith.constant 0 : i32
    %c0_i32_1 = arith.constant 0 : i32
    return %c0_i32, %c0_i32_0 : i32, i32
  }
  func.func @transform_3(%arg0: i32) -> (i32, i32) {
    %c0_i32 = arith.constant 0 : i32
    %c0_i32_0 = arith.constant 0 : i32
    %c0_i32_1 = arith.constant 0 : i32
    return %c0_i32, %c0_i32_0 : i32, i32
  }
  func.func @transform_4(%arg0: i32) -> (i32, i32) {
    %c0_i32 = arith.constant 0 : i32
    %c0_i32_0 = arith.constant 0 : i32
    %c0_i32_1 = arith.constant 0 : i32
    return %c0_i32, %c0_i32_0 : i32, i32
  }
  func.func @transform_5(%arg0: i32) -> (i32, i32) {
    %c0_i32 = arith.constant 0 : i32
    %c0_i32_0 = arith.constant 0 : i32
    %c0_i32_1 = arith.constant 0 : i32
    return %c0_i32, %c0_i32_0 : i32, i32
  }
  func.func @transform_6(%arg0: i32) -> (i32, i32) {
    %c0_i32 = arith.constant 0 : i32
    %c0_i32_0 = arith.constant 0 : i32
    %c0_i32_1 = arith.constant 0 : i32
    return %c0_i32, %c0_i32_0 : i32, i32
  }
  func.func @transform_7(%arg0: i32) -> (i32, i32) {
    %c0_i32 = arith.constant 0 : i32
    %c0_i32_0 = arith.constant 0 : i32
    %c0_i32_1 = arith.constant 0 : i32
    return %c0_i32, %c0_i32_0 : i32, i32
  }
  func.func @transform_8(%arg0: i32) -> (i32, i32) {
    %c0_i32 = arith.constant 0 : i32
    %c0_i32_0 = arith.constant 0 : i32
    return %c0_i32, %arg0 : i32, i32
  }
}

</mosaic_0001>

<llo_original>
// kernel: lp_decoder_forward.1
$region0: #{lp_decoder_forward.1}
  #allocation0 [shape = 'u32[]', space=smem, size = 0x4, offset = 0x4, fixed_abs, tag = 'smem constant byte address 0x4 - core index']
  #allocation1 [shape = 'u32[144,128]{1,0:T(1,128)}', space=vmem, size = 0x12000, scoped, tag = 'internal scratch']
  #allocation2 [shape = 'f32[1,1]{1,0:T(1,128)S(1)}', space=vmem, size = 0x200, scoped, tag = 'scoped memory for lp_decoder_forward.1']
  %s0 = inlined_call_operand.vmem [shape: f32[32,256], index: 0, kind: input, shape index: {}]
  %s1 = inlined_call_operand.vmem [shape: f32[32,256], index: 1, kind: input, shape index: {}]
  %s2 = inlined_call_operand.vmem [shape: f32[32,32], index: 2, kind: input, shape index: {}]
  %s3 = inlined_call_operand.vmem [shape: f32[32,1], index: 3, kind: input, shape index: {}]
  %s4 = inlined_call_operand.vmem [shape: f32[32,32], index: 4, kind: input, shape index: {}]
  %s5 = inlined_call_operand.vmem [shape: f32[32,1], index: 5, kind: input, shape index: {}]
  %s6 = inlined_call_operand.vmem [shape: f32[32,1], index: 6, kind: input, shape index: {}]
  %s7 = inlined_call_operand.<no memory space> [shape: f32[1,1], index: 7, kind: input, shape index: {}]
  %s8 = inlined_call_operand.vmem [shape: f32[1,256], index: 8, kind: output, shape index: {}]
  %s9 = sld [smem:[#allocation0]]
  $region42: #{lp_decoder_forward.1} parent=0
    _
  %s11 = ssub.s32 1, %s9
  %s12 = scalar_select 0, %s11, %s9
  %v13 = vstv %s7
  %14 = vst [vmem:[#allocation2] sm:$0x1] %v13
  // Predicated region
  $region2: #{lp_decoder_forward.1} parent=0 // pred_check
    _
  $region3: #{lp_decoder_forward.1} parent=0 // pred_check_branch
    %16 = sbr.rel (0) target = $region5
  $region4: #{lp_decoder_forward.1} parent=0 // pred_region
    _
  $region5: #{lp_decoder_forward.1} parent=0 // pred_fallthru
    _
  // Predicated region
  $region6: #{lp_decoder_forward.1} parent=0 // pred_check
    _
  $region7: #{lp_decoder_forward.1} parent=0 // pred_check_branch
    %18 = sbr.rel (0) target = $region9
  $region8: #{lp_decoder_forward.1} parent=0 // pred_region
    _
  $region9: #{lp_decoder_forward.1} parent=0 // pred_fallthru
    _
  // Predicated region
  $region10: #{lp_decoder_forward.1} parent=0 // pred_check
    _
  $region11: #{lp_decoder_forward.1} parent=0 // pred_check_branch
    %20 = sbr.rel (0) target = $region13
  $region12: #{lp_decoder_forward.1} parent=0 // pred_region
    _
  $region13: #{lp_decoder_forward.1} parent=0 // pred_fallthru
    _
  // Predicated region
  $region14: #{lp_decoder_forward.1} parent=0 // pred_check
    _
  $region15: #{lp_decoder_forward.1} parent=0 // pred_check_branch
    %22 = sbr.rel (0) target = $region17
  $region16: #{lp_decoder_forward.1} parent=0 // pred_region
    _
  $region17: #{lp_decoder_forward.1} parent=0 // pred_fallthru
    _
  // Predicated region
  $region18: #{lp_decoder_forward.1} parent=0 // pred_check
    _
  $region19: #{lp_decoder_forward.1} parent=0 // pred_check_branch
    %24 = sbr.rel (0) target = $region21
  $region20: #{lp_decoder_forward.1} parent=0 // pred_region
    _
  $region21: #{lp_decoder_forward.1} parent=0 // pred_fallthru
    _
  // Predicated region
  $region22: #{lp_decoder_forward.1} parent=0 // pred_check
    _
  $region23: #{lp_decoder_forward.1} parent=0 // pred_check_branch
    %26 = sbr.rel (0) target = $region25
  $region24: #{lp_decoder_forward.1} parent=0 // pred_region
    _
  $region25: #{lp_decoder_forward.1} parent=0 // pred_fallthru
    _
  // Predicated region
  $region26: #{lp_decoder_forward.1} parent=0 // pred_check
    _
  $region27: #{lp_decoder_forward.1} parent=0 // pred_check_branch
    %28 = sbr.rel (0) target = $region29
  $region28: #{lp_decoder_forward.1} parent=0 // pred_region
    _
  $region29: #{lp_decoder_forward.1} parent=0 // pred_fallthru
    _
  // Predicated region
  $region30: #{lp_decoder_forward.1} parent=0 // pred_check
    _
  $region31: #{lp_decoder_forward.1} parent=0 // pred_check_branch
    %30 = sbr.rel (0) target = $region33
  $region32: #{lp_decoder_forward.1} parent=0 // pred_region
    _
  $region33: #{lp_decoder_forward.1} parent=0 // pred_fallthru
    _
  %v31 = vld [vmem:[%s0] sm:$0xff]
  %v32 = vld [vmem:[%s0 + $0x8] sm:$0xff]
  %v33 = vld [vmem:[%s0 + $0x10] sm:$0xff]
  %v34 = vld [vmem:[%s0 + $0x18] sm:$0xff]
  %v35 = vld [vmem:[%s0 + $0x20] sm:$0xff]
  %v36 = vld [vmem:[%s0 + $0x28] sm:$0xff]
  %v37 = vld [vmem:[%s0 + $0x30] sm:$0xff]
  %v38 = vld [vmem:[%s0 + $0x38] sm:$0xff]
  %v39 = vld [vmem:[%s1] sm:$0xff]
  %v40 = vld [vmem:[%s1 + $0x8] sm:$0xff]
  %v41 = vld [vmem:[%s1 + $0x10] sm:$0xff]
  %v42 = vld [vmem:[%s1 + $0x18] sm:$0xff]
  %v43 = vld [vmem:[%s1 + $0x20] sm:$0xff]
  %v44 = vld [vmem:[%s1 + $0x28] sm:$0xff]
  %v45 = vld [vmem:[%s1 + $0x30] sm:$0xff]
  %v46 = vld [vmem:[%s1 + $0x38] sm:$0xff]
  %v47 = vmul.f32 %v31, %v39
  %v48 = vmul.f32 %v32, %v40
  %v49 = vmul.f32 %v33, %v41
  %v50 = vmul.f32 %v34, %v42
  %v51 = vmul.f32 %v35, %v43
  %v52 = vmul.f32 %v36, %v44
  %v53 = vmul.f32 %v37, %v45
  %v54 = vmul.f32 %v38, %v46
  %v55 = vld [vmem:[%s2] sm:$0xff]
  %v56 = vld [vmem:[%s2 + $0x8] sm:$0xff]
  %v57 = vld [vmem:[%s2 + $0x10] sm:$0xff]
  %v58 = vld [vmem:[%s2 + $0x18] sm:$0xff]
  %v59 = vld [vmem:[%s3] sm:$0xff]
  %v60 = vld [vmem:[%s3 + $0x8] sm:$0xff]
  %v61 = vld [vmem:[%s3 + $0x10] sm:$0xff]
  %v62 = vld [vmem:[%s3 + $0x18] sm:$0xff]
  %64 = vset.pattern.permute.xlu0 0
  %65 = vperm.xlu0 %64, %v59
  %v66 = vpop.permute.xlu0 %65
  %69 = vset.pattern.permute.xlu0 0
  %70 = vperm.xlu0 %69, %v60
  %v71 = vpop.permute.xlu0 %70
  %74 = vset.pattern.permute.xlu0 0
  %75 = vperm.xlu0 %74, %v61
  %v76 = vpop.permute.xlu0 %75
  %79 = vset.pattern.permute.xlu0 0
  %80 = vperm.xlu0 %79, %v62
  %v81 = vpop.permute.xlu0 %80
  %vm83 = vcmask 261120
  %v85 = vsel %vm83, %v55, 0
  %v88 = vsel %vm83, %v56, 0
  %v91 = vsel %vm83, %v57, 0
  %v94 = vsel %vm83, %v58, 0
  %96 = vmatprep.subr.mxu0 %v48
  %97 = vmatpush1.msra.mxu0 %v47
  %98 = vmatprep.subr.mxu0 %v50
  %99 = vmatpush1.msra.mxu0 %v49
  %100 = vmatprep.subr.mxu0 %v52
  %101 = vmatpush1.msra.mxu0 %v51
  %102 = vmatprep.subr.mxu0 %v54
  %103 = vmatpush1.msra.mxu0 %v53
  %104 = vmatprep.subr.mxu0 0.0
  %105 = vmatpush1.msra.mxu0 0.0
  %106 = vmatprep.subr.mxu0 0.0
  %107 = vmatpush1.msra.mxu0 0.0
  %108 = vmatprep.subr.mxu0 0.0
  %109 = vmatpush1.msra.mxu0 0.0
  %110 = vmatprep.subr.mxu0 0.0
  %111 = vmatpush1.msra.mxu0 0.0
  %112 = vmatprep.subr.mxu0 0.0
  %113 = vmatpush1.msra.mxu0 0.0
  %114 = vmatprep.subr.mxu0 0.0
  %115 = vmatpush1.msra.mxu0 0.0
  %116 = vmatprep.subr.mxu0 0.0
  %117 = vmatpush1.msra.mxu0 0.0
  %118 = vmatprep.subr.mxu0 0.0
  %119 = vmatpush1.msra.mxu0 0.0
  %120 = vmatprep.subr.mxu0 0.0
  %121 = vmatpush1.msra.mxu0 0.0
  %122 = vmatprep.subr.mxu0 0.0
  %123 = vmatpush1.msra.mxu0 0.0
  %124 = vmatprep.subr.mxu0 0.0
  %125 = vmatpush1.msra.mxu0 0.0
  %126 = vmatprep.subr.mxu0 0.0
  %127 = vmatpush1.msra.mxu0 0.0
  %128 = vmatprep.subr.mxu0 0.0
  %129 = vmatpush1.msra.mxu0 0.0
  %130 = vmatprep.subr.mxu0 0.0
  %131 = vmatpush1.msra.mxu0 0.0
  %132 = vmatprep.subr.mxu0 0.0
  %133 = vmatpush1.msra.mxu0 0.0
  %134 = vmatprep.subr.mxu0 0.0
  %135 = vmatpush1.msra.mxu0 0.0
  %136 = vmatprep.subr.mxu0 0.0
  %137 = vmatpush1.msra.mxu0 0.0
  %138 = vmatprep.subr.mxu0 0.0
  %139 = vmatpush1.msra.mxu0 0.0
  %140 = vmatprep.subr.mxu0 0.0
  %141 = vmatpush1.msra.mxu0 0.0
  %142 = vmatprep.subr.mxu0 0.0
  %143 = vmatpush1.msra.mxu0 0.0
  %144 = vmatprep.subr.mxu0 0.0
  %145 = vmatpush1.msra.mxu0 0.0
  %146 = vmatprep.subr.mxu0 0.0
  %147 = vmatpush1.msra.mxu0 0.0
  %148 = vmatprep.subr.mxu0 0.0
  %149 = vmatpush1.msra.mxu0 0.0
  %150 = vmatprep.subr.mxu0 0.0
  %151 = vmatpush1.msra.mxu0 0.0
  %152 = vmatprep.subr.mxu0 0.0
  %153 = vmatpush1.msra.mxu0 0.0
  %154 = vmatprep.subr.mxu0 0.0
  %155 = vmatpush1.msra.mxu0 0.0
  %156 = vmatprep.subr.mxu0 0.0
  %157 = vmatpush1.msra.mxu0 0.0
  %158 = vmatprep.subr.mxu0 0.0
  %159 = vmatpush1.msra.mxu0 0.0
  %160 = vmatprep.mubr.f32.mxu0 0.0
  %161 = vmatmul.mubr.f32.gmra.mrb[0].mxu0 %v85
  %v162 = vpop.f32.mrb[0].mxu0
  %v163 = vadd.f32 %v66, %v162
  %v164 = vpop.f32.mrb[0].mxu0
  %v165 = vadd.f32 %v66, %v164
  %166 = vmatprep.mubr.f32.mxu0 0.0
  %167 = vmatmul.mubr.f32.gmra.mrb[0].mxu0 %v88
  %v168 = vpop.f32.mrb[0].mxu0
  %v169 = vadd.f32 %v71, %v168
  %v170 = vpop.f32.mrb[0].mxu0
  %v171 = vadd.f32 %v71, %v170
  %172 = vmatprep.mubr.f32.mxu0 0.0
  %173 = vmatmul.mubr.f32.gmra.mrb[0].mxu0 %v91
  %v174 = vpop.f32.mrb[0].mxu0
  %v175 = vadd.f32 %v76, %v174
  %v176 = vpop.f32.mrb[0].mxu0
  %v177 = vadd.f32 %v76, %v176
  %178 = vmatprep.mubr.f32.mxu0 0.0
  %179 = vmatmul.mubr.f32.gmra.mrb[0].mxu0 %v94
  %v180 = vpop.f32.mrb[0].mxu0
  %v181 = vadd.f32 %v81, %v180
  %v182 = vpop.f32.mrb[0].mxu0
  %v183 = vadd.f32 %v81, %v182
  %184 = vdwg.mxu0
  %v185 = vmax.f32 %v163, 0.0
  %v186 = vmax.f32 %v165, 0.0
  %v187 = vmax.f32 %v169, 0.0
  %v188 = vmax.f32 %v171, 0.0
  %v189 = vmax.f32 %v175, 0.0
  %v190 = vmax.f32 %v177, 0.0
  %v191 = vmax.f32 %v181, 0.0
  %v192 = vmax.f32 %v183, 0.0
  %v193 = vld [vmem:[%s4] sm:$0xff]
  %v194 = vld [vmem:[%s4 + $0x8] sm:$0xff]
  %v195 = vld [vmem:[%s4 + $0x10] sm:$0xff]
  %v196 = vld [vmem:[%s4 + $0x18] sm:$0xff]
  %v197 = vld [vmem:[%s5] sm:$0xff]
  %v198 = vld [vmem:[%s5 + $0x8] sm:$0xff]
  %v199 = vld [vmem:[%s5 + $0x10] sm:$0xff]
  %v200 = vld [vmem:[%s5 + $0x18] sm:$0xff]
  %202 = vset.pattern.permute.xlu0 0
  %203 = vperm.xlu0 %202, %v197
  %v204 = vpop.permute.xlu0 %203
  %207 = vset.pattern.permute.xlu0 0
  %208 = vperm.xlu0 %207, %v198
  %v209 = vpop.permute.xlu0 %208
  %212 = vset.pattern.permute.xlu0 0
  %213 = vperm.xlu0 %212, %v199
  %v214 = vpop.permute.xlu0 %213
  %217 = vset.pattern.permute.xlu0 0
  %218 = vperm.xlu0 %217, %v200
  %v219 = vpop.permute.xlu0 %218
  %v222 = vsel %vm83, %v193, 0
  %v225 = vsel %vm83, %v194, 0
  %v228 = vsel %vm83, %v195, 0
  %v231 = vsel %vm83, %v196, 0
  %233 = vmatprep.subr.mxu0 %v186
  %234 = vmatpush1.msra.mxu0 %v185
  %235 = vmatprep.subr.mxu0 %v188
  %236 = vmatpush1.msra.mxu0 %v187
  %237 = vmatprep.subr.mxu0 %v190
  %238 = vmatpush1.msra.mxu0 %v189
  %239 = vmatprep.subr.mxu0 %v192
  %240 = vmatpush1.msra.mxu0 %v191
  %241 = vmatprep.subr.mxu0 0.0
  %242 = vmatpush1.msra.mxu0 0.0
  %243 = vmatprep.subr.mxu0 0.0
  %244 = vmatpush1.msra.mxu0 0.0
  %245 = vmatprep.subr.mxu0 0.0
  %246 = vmatpush1.msra.mxu0 0.0
  %247 = vmatprep.subr.mxu0 0.0
  %248 = vmatpush1.msra.mxu0 0.0
  %249 = vmatprep.subr.mxu0 0.0
  %250 = vmatpush1.msra.mxu0 0.0
  %251 = vmatprep.subr.mxu0 0.0
  %252 = vmatpush1.msra.mxu0 0.0
  %253 = vmatprep.subr.mxu0 0.0
  %254 = vmatpush1.msra.mxu0 0.0
  %255 = vmatprep.subr.mxu0 0.0
  %256 = vmatpush1.msra.mxu0 0.0
  %257 = vmatprep.subr.mxu0 0.0
  %258 = vmatpush1.msra.mxu0 0.0
  %259 = vmatprep.subr.mxu0 0.0
  %260 = vmatpush1.msra.mxu0 0.0
  %261 = vmatprep.subr.mxu0 0.0
  %262 = vmatpush1.msra.mxu0 0.0
  %263 = vmatprep.subr.mxu0 0.0
  %264 = vmatpush1.msra.mxu0 0.0
  %265 = vmatprep.subr.mxu0 0.0
  %266 = vmatpush1.msra.mxu0 0.0
  %267 = vmatprep.subr.mxu0 0.0
  %268 = vmatpush1.msra.mxu0 0.0
  %269 = vmatprep.subr.mxu0 0.0
  %270 = vmatpush1.msra.mxu0 0.0
  %271 = vmatprep.subr.mxu0 0.0
  %272 = vmatpush1.msra.mxu0 0.0
  %273 = vmatprep.subr.mxu0 0.0
  %274 = vmatpush1.msra.mxu0 0.0
  %275 = vmatprep.subr.mxu0 0.0
  %276 = vmatpush1.msra.mxu0 0.0
  %277 = vmatprep.subr.mxu0 0.0
  %278 = vmatpush1.msra.mxu0 0.0
  %279 = vmatprep.subr.mxu0 0.0
  %280 = vmatpush1.msra.mxu0 0.0
  %281 = vmatprep.subr.mxu0 0.0
  %282 = vmatpush1.msra.mxu0 0.0
  %283 = vmatprep.subr.mxu0 0.0
  %284 = vmatpush1.msra.mxu0 0.0
  %285 = vmatprep.subr.mxu0 0.0
  %286 = vmatpush1.msra.mxu0 0.0
  %287 = vmatprep.subr.mxu0 0.0
  %288 = vmatpush1.msra.mxu0 0.0
  %289 = vmatprep.subr.mxu0 0.0
  %290 = vmatpush1.msra.mxu0 0.0
  %291 = vmatprep.subr.mxu0 0.0
  %292 = vmatpush1.msra.mxu0 0.0
  %293 = vmatprep.subr.mxu0 0.0
  %294 = vmatpush1.msra.mxu0 0.0
  %295 = vmatprep.subr.mxu0 0.0
  %296 = vmatpush1.msra.mxu0 0.0
  %297 = vmatprep.mubr.f32.mxu0 0.0
  %298 = vmatmul.mubr.f32.gmra.mrb[0].mxu0 %v222
  %v299 = vpop.f32.mrb[0].mxu0
  %v300 = vadd.f32 %v204, %v299
  %v301 = vpop.f32.mrb[0].mxu0
  %v302 = vadd.f32 %v204, %v301
  %303 = vmatprep.mubr.f32.mxu0 0.0
  %304 = vmatmul.mubr.f32.gmra.mrb[0].mxu0 %v225
  %v305 = vpop.f32.mrb[0].mxu0
  %v306 = vadd.f32 %v209, %v305
  %v307 = vpop.f32.mrb[0].mxu0
  %v308 = vadd.f32 %v209, %v307
  %309 = vmatprep.mubr.f32.mxu0 0.0
  %310 = vmatmul.mubr.f32.gmra.mrb[0].mxu0 %v228
  %v311 = vpop.f32.mrb[0].mxu0
  %v312 = vadd.f32 %v214, %v311
  %v313 = vpop.f32.mrb[0].mxu0
  %v314 = vadd.f32 %v214, %v313
  %315 = vmatprep.mubr.f32.mxu0 0.0
  %316 = vmatmul.mubr.f32.gmra.mrb[0].mxu0 %v231
  %v317 = vpop.f32.mrb[0].mxu0
  %v318 = vadd.f32 %v219, %v317
  %v319 = vpop.f32.mrb[0].mxu0
  %v320 = vadd.f32 %v219, %v319
  %321 = vdwg.mxu0
  %v322 = vmax.f32 %v300, 0.0
  %v323 = vmax.f32 %v302, 0.0
  %v324 = vmax.f32 %v306, 0.0
  %v325 = vmax.f32 %v308, 0.0
  %v326 = vmax.f32 %v312, 0.0
  %v327 = vmax.f32 %v314, 0.0
  %v328 = vmax.f32 %v318, 0.0
  %v329 = vmax.f32 %v320, 0.0
  %v330 = vld [vmem:[%s6] sm:$0xff]
  %v331 = vld [vmem:[%s6 + $0x8] sm:$0xff]
  %v332 = vld [vmem:[%s6 + $0x10] sm:$0xff]
  %v333 = vld [vmem:[%s6 + $0x18] sm:$0xff]
  %335 = vset.pattern.permute.xlu0 0
  %336 = vperm.xlu0 %335, %v330
  %v337 = vpop.permute.xlu0 %336
  %340 = vset.pattern.permute.xlu0 0
  %341 = vperm.xlu0 %340, %v331
  %v342 = vpop.permute.xlu0 %341
  %345 = vset.pattern.permute.xlu0 0
  %346 = vperm.xlu0 %345, %v332
  %v347 = vpop.permute.xlu0 %346
  %350 = vset.pattern.permute.xlu0 0
  %351 = vperm.xlu0 %350, %v333
  %v352 = vpop.permute.xlu0 %351
  %v354 = vmul.f32 %v322, %v337
  %v355 = vmul.f32 %v323, %v337
  %v356 = vmul.f32 %v324, %v342
  %v357 = vmul.f32 %v325, %v342
  %v358 = vmul.f32 %v326, %v347
  %v359 = vmul.f32 %v327, %v347
  %v360 = vmul.f32 %v328, %v352
  %v361 = vmul.f32 %v329, %v352
  %v362 = vadd.f32 %v354, %v356
  %v363 = vadd.f32 %v362, %v358
  %v364 = vadd.f32 %v363, %v360
  %v365 = vrot.slane %v364, 4
  %v366 = vadd.f32 %v364, %v365
  %v367 = vrot.slane %v366, 2
  %v368 = vadd.f32 %v366, %v367
  %v369 = vrot.slane %v368, 1
  %v370 = vadd.f32 %v368, %v369
  %v371 = vadd.f32 %v355, %v357
  %v372 = vadd.f32 %v371, %v359
  %v373 = vadd.f32 %v372, %v361
  %v374 = vrot.slane %v373, 4
  %v375 = vadd.f32 %v373, %v374
  %v376 = vrot.slane %v375, 2
  %v377 = vadd.f32 %v375, %v376
  %v378 = vrot.slane %v377, 1
  %v379 = vadd.f32 %v377, %v378
  %v380 = vld [vmem:[#allocation2] sm:$0x1]
  %382 = vset.pattern.permute.xlu0 0
  %383 = vperm.xlu0 %382, %v380
  %v384 = vpop.permute.xlu0 %383
  %v386 = vlaneseq
  %v387 = vshrl.u32 %v386, 7
  %v388 = vsub.s32 0, %v387
  %v389 = vrot.slane %v384, %v388
  %v390 = vadd.f32 %v370, %v389
  %v391 = vadd.f32 %v379, %v389
  %v392 = vxor.u32 %v390, 2147483648
  %v393 = vxor.u32 %v391, 2147483648
  %v394 = vmul.f32 %v392, 1.442695
  %v395 = vpow.pop %v394
  %v396 = vmul.f32 %v393, 1.442695
  %v397 = vpow.pop %v396
  %v398 = vadd.f32 %v395, 1.0
  %v399 = vadd.f32 %v397, 1.0
  %v400 = vrcp.pop %v398
  %v401 = vmul.f32 1.0, %v400
  %v402 = vrcp.pop %v399
  %v403 = vmul.f32 1.0, %v402
  %v406 = vcombine.low %v401, %v403
  %v408 = vunpack.c.l.s4 1966171168
  %v409 = vunpack.c.0.s8 %v408
  %v410 = vlaneseq
  %v411 = vshrl.u32 %v410, 7
  %v412 = vsub.s32 %v409, %v411
  %v413 = vrot.slane %v406, %v412
  %v415 = vunpack.c.l.s4 1966171168
  %v416 = vunpack.c.0.s8 %v415
  %v417 = vlaneseq
  %v418 = vshrl.u32 %v417, 7
  %v419 = vsub.s32 %v416, %v418
  %v420 = vrot.slane %v413, %v419
  %v422 = vlaneseq
  %vm423 = vcmp.ge.s32.totalorder %v422, 0
  %vm424 = vcmp.lt.s32.totalorder %v422, 256
  %vm425 = vmand %vm423, %vm424
  %426 = vst.msk [vmem:[%s8] sm:$0x3] %vm425, %v420
  // Predicated region
  $region34: #{lp_decoder_forward.1} parent=0 // pred_check
    _
  $region35: #{lp_decoder_forward.1} parent=0 // pred_check_branch
    %428 = sbr.rel (0) target = $region37
  $region36: #{lp_decoder_forward.1} parent=0 // pred_region
    _
  $region37: #{lp_decoder_forward.1} parent=0 // pred_fallthru
    _
  // Predicated region
  $region38: #{lp_decoder_forward.1} parent=0 // pred_check
    _
  $region39: #{lp_decoder_forward.1} parent=0 // pred_check_branch
    %430 = sbr.rel (0) target = $region41
  $region40: #{lp_decoder_forward.1} parent=0 // pred_region
    _
  $region41: #{lp_decoder_forward.1} parent=0 // pred_fallthru
    _

</llo_original>
